<compile_context>
chip_gen: v7x
topology: tpu7x:2x2x1
jax: 0.10.0
libtpu: 0.0.40
codegen_flags: <defaults>
</compile_context>

<pallas_src>
import jax
import jax.numpy as jnp
from jax.experimental import pallas as pl
from jax.experimental.pallas import tpu as pltpu

# Problem sizes (small, consistent with the module's forward)
N = 2          # batch
C = 3          # RGB channels (mean/std have 3 entries)
H = W = 16     # spatial
K = 8          # number of banknote classes
F = C * H * W  # flattened features = 768

IMAGENET_MEAN = jnp.array([0.485, 0.456, 0.406], dtype=jnp.float32)
IMAGENET_STD = jnp.array([0.229, 0.224, 0.225], dtype=jnp.float32)

TILE_CAP = 1024   # rows/tile: 1024 x 768 f32 = 3 MiB, x2 double-buffer = 6 MiB VMEM
MIN_SPLIT = 512   # only split across >=2 grid steps if each tile keeps >=512 rows


def _round_up(x, m):
    return ((x + m - 1) // m) * m


def _head_softmax_kernel(x_ref, w_ref, b_ref, o_ref):
    """Fused (pre-folded) linear head + softmax.

    x_ref: (TILE_N, F) f32    flattened raw pixels (normalization folded into W'/b')
    w_ref: (F, K)      bf16   folded classifier weight  W' = scale * W
    b_ref: (1, K)      f32    folded classifier bias    b' = shift @ W + b
    o_ref: (TILE_N, K) f32    softmax probabilities
    """
    # bf16 cast happens here (VPU, hidden under the DMA); MXU accumulates in f32.
    x_bf16 = x_ref[...].astype(jnp.bfloat16)
    logits = jnp.dot(x_bf16, w_ref[...],
                     preferred_element_type=jnp.float32) + b_ref[...]
    # Softmax(dim=1), max-subtraction for stability; all f32 (v5e has no bf16 VALU/EUP).
    m = jnp.max(logits, axis=1, keepdims=True)
    e = jnp.exp(logits - m)
    denom = jnp.sum(e, axis=1, keepdims=True)
    o_ref[...] = (e / denom).astype(o_ref.dtype)   # exact divide: rows sum to 1


def _head_softmax_call(x_f32, w_bf16, b_f32, n_rows, tile_n):
    """One pallas_call over the first `n_rows` rows of x_f32 (n_rows % tile_n == 0)."""
    f = x_f32.shape[1]
    k = w_bf16.shape[1]
    grid = (n_rows // tile_n,)
    cost = pl.CostEstimate(
        flops=2 * n_rows * f * k,
        transcendentals=n_rows * k,
        bytes_accessed=n_rows * f * 4 + f * k * 2 + k * 4 + n_rows * k * 4,
    )
    return pl.pallas_call(
        _head_softmax_kernel,
        out_shape=jax.ShapeDtypeStruct((n_rows, k), jnp.float32),
        grid_spec=pltpu.PrefetchScalarGridSpec(
            num_scalar_prefetch=0,
            grid=grid,
            in_specs=[
                pl.BlockSpec((tile_n, f), lambda i: (i, 0)),  # x: tiled over batch (f32)
                pl.BlockSpec((f, k), lambda i: (0, 0)),       # W': resident across grid
                pl.BlockSpec((1, k), lambda i: (0, 0)),       # b': resident across grid
            ],
            out_specs=pl.BlockSpec((tile_n, k), lambda i: (i, 0)),
        ),
        compiler_params=pltpu.CompilerParams(
            dimension_semantics=("parallel",),
        ),
        cost_estimate=cost,
    )(x_f32, w_bf16, b_f32)


def _pick_tile(n):
    """Big batch tile (amortize ~0.35us/step overhead), multiple of 16, and >=2
    grid steps for medium/large batches so v7x's two TensorCores both get work."""
    if n >= 2 * TILE_CAP:
        return TILE_CAP
    if n >= 2 * MIN_SPLIT:
        return min(TILE_CAP, _round_up(pl.cdiv(n, 2), 16))
    return _round_up(max(n, 1), 16)


def export_ready_forward(x_nchw, w, b):
    """x_nchw: (N, C, H, W) float32 raw pixels in [0, 255] -> (N, K) probabilities."""
    n, c, h, wd = x_nchw.shape
    f = c * h * wd
    k = w.shape[1]

    # --- Wrapper-side constant folding (exactly equivalent to the per-channel affine) ---
    # normalize_image: x/255 -> (x - mean)/std  ==  x * scale_c + shift_c  per channel,
    # folded into the linear layer: (x*s + t) @ W + b == x @ (s[:,None]*W) + (t @ W + b).
    scale_c = 1.0 / (255.0 * IMAGENET_STD)              # (C,)
    shift_c = -IMAGENET_MEAN / IMAGENET_STD             # (C,)
    scale = jnp.repeat(scale_c, h * wd).reshape(f, 1)   # channel-major matches NCHW flatten
    shift = jnp.repeat(shift_c, h * wd).reshape(1, f)
    w_fold = (scale * w).astype(jnp.bfloat16)           # (F, K) bf16 MXU operand
    b_fold = (shift @ w + b).astype(jnp.float32)        # (1, K) f32

    # x stays f32: no wrapper-side cast, no full-array pad -> x streamed from HBM once.
    x_flat = x_nchw.reshape(n, f)

    tile_n = _pick_tile(n)
    n_main = (n // tile_n) * tile_n       # rows covered by full tiles (no copy needed)
    n_rem = n - n_main                    # < tile_n leftover rows

    parts = []
    if n_main > 0:
        # Grid covers only the first n_main rows of the (un-copied, un-padded) array.
        parts.append(_head_softmax_call(x_flat, w_fold, b_fold, n_main, tile_n))
    if n_rem > 0:
        # Remainder: slice + pad only the < tile_n tail rows (small copy), one-step call.
        rem_tile = _round_up(n_rem, 16)
        x_rem = x_flat[n_main:]
        if rem_tile != n_rem:
            x_rem = jnp.pad(x_rem, ((0, rem_tile - n_rem), (0, 0)))
        parts.append(
            _head_softmax_call(x_rem, w_fold, b_fold, rem_tile, rem_tile)[:n_rem])

    return parts[0] if len(parts) == 1 else jnp.concatenate(parts, axis=0)


if __name__ == "__main__":
    key = jax.random.PRNGKey(0)
    k_x, k_w, k_b = jax.random.split(key, 3)

    # Deterministic inputs: raw pixel values in [0, 255], NCHW like PyTorch.
    x = jax.random.uniform(k_x, (N, C, H, W), dtype=jnp.float32,
                           minval=0.0, maxval=255.0)

    # Deterministic stand-in parameters for the wrapped `model` (Flatten + Linear(F, K)).
    # TODO(synk): the real wrapped `model` (a CNN backbone) is not specified; a linear
    # classifier head stands in for it.
    w = jax.random.normal(k_w, (F, K), dtype=jnp.float32) * 0.02
    b = jax.random.normal(k_b, (1, K), dtype=jnp.float32) * 0.01

    probs = export_ready_forward(x, w, b)
    probs = jax.block_until_ready(probs)

    # Sanity: exact softmax divide -> rows sum to 1 up to f32 rounding.
    assert probs.shape == (N, K)
    assert bool(jnp.all(jnp.abs(jnp.sum(probs, axis=1) - 1.0) < 1e-5))

    # Cross-check against a pure-JAX f32 reference of the original module semantics
    # (tolerance covers bf16 MXU operands, ~1e-3 relative on logits).
    xn = x / 255.0
    xn = (xn - IMAGENET_MEAN[None, :, None, None]) / IMAGENET_STD[None, :, None, None]
    logits_ref = xn.reshape(N, F) @ w + b
    probs_ref = jax.nn.softmax(logits_ref, axis=1)
    assert bool(jnp.all(jnp.abs(probs - probs_ref) < 5e-3))

    print("KERNEL_OK")
</pallas_src>

<mosaic_0001>
module attributes {stable_mosaic.version = 11 : i64} {
  func.func @_head_softmax_kernel(%arg0: i32, %arg1: memref<16x768xf32, #tpu.memory_space<vmem>>, %arg2: memref<768x8xbf16, #tpu.memory_space<vmem>>, %arg3: memref<1x8xf32, #tpu.memory_space<vmem>>, %arg4: memref<16x8xf32, #tpu.memory_space<vmem>>) attributes {dimension_semantics = [#tpu.dimension_semantics<parallel>], iteration_bounds = array<i64: 1>, scalar_prefetch = 0 : i64, scratch_operands = 0 : i64, tpu.core_type = #tpu.core_type<tc>, window_params = [{transform_indices = @transform_0, window_bounds = array<i64: 16, 768>}, {pipeline_mode = #tpu.pipeline_mode<synchronous>, transform_indices = @transform_1, window_bounds = array<i64: 768, 8>}, {pipeline_mode = #tpu.pipeline_mode<synchronous>, transform_indices = @transform_2, window_bounds = array<i64: 1, 8>}, {transform_indices = @transform_3, window_bounds = array<i64: 16, 8>}]} {
    %c0 = arith.constant 0 : index
    %c0_0 = arith.constant 0 : index
    %0 = vector.load %arg1[%c0, %c0_0] : memref<16x768xf32, #tpu.memory_space<vmem>>, vector<16x768xf32>
    %1 = arith.truncf %0 : vector<16x768xf32> to vector<16x768xbf16>
    %c0_1 = arith.constant 0 : index
    %c0_2 = arith.constant 0 : index
    %2 = vector.load %arg2[%c0_1, %c0_2] : memref<768x8xbf16, #tpu.memory_space<vmem>>, vector<768x8xbf16>
    %cst = arith.constant dense<0.000000e+00> : vector<16x8xf32>
    %3 = tpu.matmul %1, %2, %cst {dimension_numbers = #tpu.dot_dimension_numbers<[1], [0], [0], [1], [0, 0, 1, 1], [], []>} : vector<16x768xbf16>, vector<768x8xbf16>, vector<16x8xf32> -> vector<16x8xf32>
    %c0_3 = arith.constant 0 : index
    %c0_4 = arith.constant 0 : index
    %4 = vector.load %arg3[%c0_3, %c0_4] : memref<1x8xf32, #tpu.memory_space<vmem>>, vector<1x8xf32>
    %5 = vector.broadcast %4 : vector<1x8xf32> to vector<16x8xf32>
    %6 = arith.addf %3, %5 : vector<16x8xf32>
    %cst_5 = arith.constant dense<0xFF800000> : vector<16xf32>
    %7 = vector.multi_reduction <maximumf>, %6, %cst_5 [1] : vector<16x8xf32> to vector<16xf32>
    %8 = vector.shape_cast %7 : vector<16xf32> to vector<16x1xf32>
    %9 = vector.broadcast %8 : vector<16x1xf32> to vector<16x8xf32>
    %10 = arith.subf %6, %9 : vector<16x8xf32>
    %11 = math.exp %10 : vector<16x8xf32>
    %cst_6 = arith.constant dense<0.000000e+00> : vector<16xf32>
    %12 = vector.multi_reduction <add>, %11, %cst_6 [1] : vector<16x8xf32> to vector<16xf32>
    %13 = vector.shape_cast %12 : vector<16xf32> to vector<16x1xf32>
    %14 = vector.broadcast %13 : vector<16x1xf32> to vector<16x8xf32>
    %15 = arith.divf %11, %14 : vector<16x8xf32>
    %c0_7 = arith.constant 0 : index
    %c0_8 = arith.constant 0 : index
    %16 = vector.load %arg4[%c0_7, %c0_8] : memref<16x8xf32, #tpu.memory_space<vmem>>, vector<16x8xf32>
    tpu.vector_store %arg4[%c0_7, %c0_8], %15 {strides = array<i32>} : memref<16x8xf32, #tpu.memory_space<vmem>>, vector<16x8xf32>,
    return
  }
  func.func @transform_0(%arg0: i32) -> (i32, i32) {
    %c0_i32 = arith.constant 0 : i32
    %c0_i32_0 = arith.constant 0 : i32
    return %arg0, %c0_i32 : i32, i32
  }
  func.func @transform_1(%arg0: i32) -> (i32, i32) {
    %c0_i32 = arith.constant 0 : i32
    %c0_i32_0 = arith.constant 0 : i32
    %c0_i32_1 = arith.constant 0 : i32
    return %c0_i32, %c0_i32_0 : i32, i32
  }
  func.func @transform_2(%arg0: i32) -> (i32, i32) {
    %c0_i32 = arith.constant 0 : i32
    %c0_i32_0 = arith.constant 0 : i32
    %c0_i32_1 = arith.constant 0 : i32
    return %c0_i32, %c0_i32_0 : i32, i32
  }
  func.func @transform_3(%arg0: i32) -> (i32, i32) {
    %c0_i32 = arith.constant 0 : i32
    %c0_i32_0 = arith.constant 0 : i32
    return %arg0, %c0_i32 : i32, i32
  }
}

</mosaic_0001>

<llo_original>
// kernel: tpu_custom_call.1
$region0: #{tpu_custom_call.1}
  #allocation0 [shape = 'u32[]', space=smem, size = 0x4, offset = 0x4, fixed_abs, tag = 'smem constant byte address 0x4 - core index']
  #allocation1 [shape = 'u32[144,128]{1,0:T(1,128)}', space=vmem, size = 0x12000, scoped, tag = 'internal scratch']
  %s0 = inlined_call_operand.vmem [shape: f32[16,768], index: 0, kind: input, shape index: {}]
  %s1 = inlined_call_operand.vmem [shape: bf16[768,8], index: 1, kind: input, shape index: {}]
  %s2 = inlined_call_operand.vmem [shape: f32[1,8], index: 2, kind: input, shape index: {}]
  %s3 = inlined_call_operand.vmem [shape: f32[16,8], index: 3, kind: output, shape index: {}]
  %s4 = sld [smem:[#allocation0]]
  $region22: #{tpu_custom_call.1} parent=0
    _
  %s6 = ssub.s32 1, %s4
  %s7 = scalar_select 0, %s6, %s4
  // Predicated region
  $region2: #{tpu_custom_call.1} parent=0 // pred_check
    _
  $region3: #{tpu_custom_call.1} parent=0 // pred_check_branch
    %9 = sbr.rel (0) target = $region5
  $region4: #{tpu_custom_call.1} parent=0 // pred_region
    _
  $region5: #{tpu_custom_call.1} parent=0 // pred_fallthru
    _
  // Predicated region
  $region6: #{tpu_custom_call.1} parent=0 // pred_check
    _
  $region7: #{tpu_custom_call.1} parent=0 // pred_check_branch
    %11 = sbr.rel (0) target = $region9
  $region8: #{tpu_custom_call.1} parent=0 // pred_region
    _
  $region9: #{tpu_custom_call.1} parent=0 // pred_fallthru
    _
  // Predicated region
  $region10: #{tpu_custom_call.1} parent=0 // pred_check
    _
  $region11: #{tpu_custom_call.1} parent=0 // pred_check_branch
    %13 = sbr.rel (0) target = $region13
  $region12: #{tpu_custom_call.1} parent=0 // pred_region
    _
  $region13: #{tpu_custom_call.1} parent=0 // pred_fallthru
    _
  %v15 = vld [vmem:[%s0] sm:$0xff]
  %v16 = vld [vmem:[%s0 + $0x8] sm:$0xff]
  %v17 = vld [vmem:[%s0 + $0x10] sm:$0xff]
  %v18 = vld [vmem:[%s0 + $0x18] sm:$0xff]
  %v19 = vld [vmem:[%s0 + $0x20] sm:$0xff]
  %v20 = vld [vmem:[%s0 + $0x28] sm:$0xff]
  %v21 = vld [vmem:[%s0 + $0x30] sm:$0xff]
  %v22 = vld [vmem:[%s0 + $0x38] sm:$0xff]
  %v23 = vld [vmem:[%s0 + $0x40] sm:$0xff]
  %v24 = vld [vmem:[%s0 + $0x48] sm:$0xff]
  %v25 = vld [vmem:[%s0 + $0x50] sm:$0xff]
  %v26 = vld [vmem:[%s0 + $0x58] sm:$0xff]
  %v27 = vpack.c.bf16 %v21, %v15
  %v28 = vpack.c.bf16 %v22, %v16
  %v29 = vpack.c.bf16 %v23, %v17
  %v30 = vpack.c.bf16 %v24, %v18
  %v31 = vpack.c.bf16 %v25, %v19
  %v32 = vpack.c.bf16 %v26, %v20
  %v33 = vld [vmem:[%s1] sm:$0xf]
  %v34 = vld [vmem:[%s1 + $0x4] sm:$0xf]
  %v35 = vld [vmem:[%s1 + $0x8] sm:$0xf]
  %v36 = vld [vmem:[%s1 + $0xc] sm:$0xf]
  %v37 = vld [vmem:[%s1 + $0x10] sm:$0xf]
  %v38 = vld [vmem:[%s1 + $0x14] sm:$0xf]
  %v39 = vld [vmem:[%s1 + $0x18] sm:$0xf]
  %v40 = vld [vmem:[%s1 + $0x1c] sm:$0xf]
  %v41 = vld [vmem:[%s1 + $0x20] sm:$0xf]
  %v42 = vld [vmem:[%s1 + $0x24] sm:$0xf]
  %v43 = vld [vmem:[%s1 + $0x28] sm:$0xf]
  %v44 = vld [vmem:[%s1 + $0x2c] sm:$0xf]
  %v45 = vld [vmem:[%s1 + $0x30] sm:$0xf]
  %v46 = vld [vmem:[%s1 + $0x34] sm:$0xf]
  %v47 = vld [vmem:[%s1 + $0x38] sm:$0xf]
  %v48 = vld [vmem:[%s1 + $0x3c] sm:$0xf]
  %v49 = vld [vmem:[%s1 + $0x40] sm:$0xf]
  %v50 = vld [vmem:[%s1 + $0x44] sm:$0xf]
  %v51 = vld [vmem:[%s1 + $0x48] sm:$0xf]
  %v52 = vld [vmem:[%s1 + $0x4c] sm:$0xf]
  %v53 = vld [vmem:[%s1 + $0x50] sm:$0xf]
  %v54 = vld [vmem:[%s1 + $0x54] sm:$0xf]
  %v55 = vld [vmem:[%s1 + $0x58] sm:$0xf]
  %v56 = vld [vmem:[%s1 + $0x5c] sm:$0xf]
  %v57 = vld [vmem:[%s1 + $0x60] sm:$0xf]
  %v58 = vld [vmem:[%s1 + $0x64] sm:$0xf]
  %v59 = vld [vmem:[%s1 + $0x68] sm:$0xf]
  %v60 = vld [vmem:[%s1 + $0x6c] sm:$0xf]
  %v61 = vld [vmem:[%s1 + $0x70] sm:$0xf]
  %v62 = vld [vmem:[%s1 + $0x74] sm:$0xf]
  %v63 = vld [vmem:[%s1 + $0x78] sm:$0xf]
  %v64 = vld [vmem:[%s1 + $0x7c] sm:$0xf]
  %v65 = vld [vmem:[%s1 + $0x80] sm:$0xf]
  %v66 = vld [vmem:[%s1 + $0x84] sm:$0xf]
  %v67 = vld [vmem:[%s1 + $0x88] sm:$0xf]
  %v68 = vld [vmem:[%s1 + $0x8c] sm:$0xf]
  %v69 = vld [vmem:[%s1 + $0x90] sm:$0xf]
  %v70 = vld [vmem:[%s1 + $0x94] sm:$0xf]
  %v71 = vld [vmem:[%s1 + $0x98] sm:$0xf]
  %v72 = vld [vmem:[%s1 + $0x9c] sm:$0xf]
  %v73 = vld [vmem:[%s1 + $0xa0] sm:$0xf]
  %v74 = vld [vmem:[%s1 + $0xa4] sm:$0xf]
  %v75 = vld [vmem:[%s1 + $0xa8] sm:$0xf]
  %v76 = vld [vmem:[%s1 + $0xac] sm:$0xf]
  %v77 = vld [vmem:[%s1 + $0xb0] sm:$0xf]
  %v78 = vld [vmem:[%s1 + $0xb4] sm:$0xf]
  %v79 = vld [vmem:[%s1 + $0xb8] sm:$0xf]
  %v80 = vld [vmem:[%s1 + $0xbc] sm:$0xf]
  %v81 = vld [vmem:[%s1 + $0xc0] sm:$0xf]
  %v82 = vld [vmem:[%s1 + $0xc4] sm:$0xf]
  %v83 = vld [vmem:[%s1 + $0xc8] sm:$0xf]
  %v84 = vld [vmem:[%s1 + $0xcc] sm:$0xf]
  %v85 = vld [vmem:[%s1 + $0xd0] sm:$0xf]
  %v86 = vld [vmem:[%s1 + $0xd4] sm:$0xf]
  %v87 = vld [vmem:[%s1 + $0xd8] sm:$0xf]
  %v88 = vld [vmem:[%s1 + $0xdc] sm:$0xf]
  %v89 = vld [vmem:[%s1 + $0xe0] sm:$0xf]
  %v90 = vld [vmem:[%s1 + $0xe4] sm:$0xf]
  %v91 = vld [vmem:[%s1 + $0xe8] sm:$0xf]
  %v92 = vld [vmem:[%s1 + $0xec] sm:$0xf]
  %v93 = vld [vmem:[%s1 + $0xf0] sm:$0xf]
  %v94 = vld [vmem:[%s1 + $0xf4] sm:$0xf]
  %v95 = vld [vmem:[%s1 + $0xf8] sm:$0xf]
  %v96 = vld [vmem:[%s1 + $0xfc] sm:$0xf]
  %v97 = vld [vmem:[%s1 + $0x100] sm:$0xf]
  %v98 = vld [vmem:[%s1 + $0x104] sm:$0xf]
  %v99 = vld [vmem:[%s1 + $0x108] sm:$0xf]
  %v100 = vld [vmem:[%s1 + $0x10c] sm:$0xf]
  %v101 = vld [vmem:[%s1 + $0x110] sm:$0xf]
  %v102 = vld [vmem:[%s1 + $0x114] sm:$0xf]
  %v103 = vld [vmem:[%s1 + $0x118] sm:$0xf]
  %v104 = vld [vmem:[%s1 + $0x11c] sm:$0xf]
  %v105 = vld [vmem:[%s1 + $0x120] sm:$0xf]
  %v106 = vld [vmem:[%s1 + $0x124] sm:$0xf]
  %v107 = vld [vmem:[%s1 + $0x128] sm:$0xf]
  %v108 = vld [vmem:[%s1 + $0x12c] sm:$0xf]
  %v109 = vld [vmem:[%s1 + $0x130] sm:$0xf]
  %v110 = vld [vmem:[%s1 + $0x134] sm:$0xf]
  %v111 = vld [vmem:[%s1 + $0x138] sm:$0xf]
  %v112 = vld [vmem:[%s1 + $0x13c] sm:$0xf]
  %v113 = vld [vmem:[%s1 + $0x140] sm:$0xf]
  %v114 = vld [vmem:[%s1 + $0x144] sm:$0xf]
  %v115 = vld [vmem:[%s1 + $0x148] sm:$0xf]
  %v116 = vld [vmem:[%s1 + $0x14c] sm:$0xf]
  %v117 = vld [vmem:[%s1 + $0x150] sm:$0xf]
  %v118 = vld [vmem:[%s1 + $0x154] sm:$0xf]
  %v119 = vld [vmem:[%s1 + $0x158] sm:$0xf]
  %v120 = vld [vmem:[%s1 + $0x15c] sm:$0xf]
  %v121 = vld [vmem:[%s1 + $0x160] sm:$0xf]
  %v122 = vld [vmem:[%s1 + $0x164] sm:$0xf]
  %v123 = vld [vmem:[%s1 + $0x168] sm:$0xf]
  %v124 = vld [vmem:[%s1 + $0x16c] sm:$0xf]
  %v125 = vld [vmem:[%s1 + $0x170] sm:$0xf]
  %v126 = vld [vmem:[%s1 + $0x174] sm:$0xf]
  %v127 = vld [vmem:[%s1 + $0x178] sm:$0xf]
  %v128 = vld [vmem:[%s1 + $0x17c] sm:$0xf]
  %v129 = vld [vmem:[%s2] sm:$0x1]
  %v131 = vlaneseq
  %v132 = vshrl.u32 %v131, 7
  %v133 = vsub.s32 0, %v132
  %v134 = vrot.slane %v129, %v133
  %v232 = vunpack.c.l.b16 %v33
  %v233 = vunpack.c.l.b16 %v34
  %v234 = vunpack.c.l.b16 %v35
  %v235 = vunpack.c.l.b16 %v36
  %v236 = vunpack.c.l.b16 %v37
  %v237 = vunpack.c.l.b16 %v38
  %v238 = vunpack.c.l.b16 %v39
  %v239 = vunpack.c.l.b16 %v40
  %v240 = vunpack.c.l.b16 %v41
  %v241 = vunpack.c.l.b16 %v42
  %v242 = vunpack.c.l.b16 %v43
  %v243 = vunpack.c.l.b16 %v44
  %v244 = vunpack.c.l.b16 %v45
  %v245 = vunpack.c.l.b16 %v46
  %v246 = vunpack.c.l.b16 %v47
  %v247 = vunpack.c.l.b16 %v48
  %v248 = vunpack.c.l.b16 %v49
  %v249 = vunpack.c.l.b16 %v50
  %v250 = vunpack.c.l.b16 %v51
  %v251 = vunpack.c.l.b16 %v52
  %v252 = vunpack.c.l.b16 %v53
  %v253 = vunpack.c.l.b16 %v54
  %v254 = vunpack.c.l.b16 %v55
  %v255 = vunpack.c.l.b16 %v56
  %v256 = vunpack.c.l.b16 %v57
  %v257 = vunpack.c.l.b16 %v58
  %v258 = vunpack.c.l.b16 %v59
  %v259 = vunpack.c.l.b16 %v60
  %v260 = vunpack.c.l.b16 %v61
  %v261 = vunpack.c.l.b16 %v62
  %v262 = vunpack.c.l.b16 %v63
  %v263 = vunpack.c.l.b16 %v64
  %v264 = vunpack.c.l.b16 %v65
  %v265 = vunpack.c.l.b16 %v66
  %v266 = vunpack.c.l.b16 %v67
  %v267 = vunpack.c.l.b16 %v68
  %v268 = vunpack.c.l.b16 %v69
  %v269 = vunpack.c.l.b16 %v70
  %v270 = vunpack.c.l.b16 %v71
  %v271 = vunpack.c.l.b16 %v72
  %v272 = vunpack.c.l.b16 %v73
  %v273 = vunpack.c.l.b16 %v74
  %v274 = vunpack.c.l.b16 %v75
  %v275 = vunpack.c.l.b16 %v76
  %v276 = vunpack.c.l.b16 %v77
  %v277 = vunpack.c.l.b16 %v78
  %v278 = vunpack.c.l.b16 %v79
  %v279 = vunpack.c.l.b16 %v80
  %v280 = vunpack.c.l.b16 %v81
  %v281 = vunpack.c.l.b16 %v82
  %v282 = vunpack.c.l.b16 %v83
  %v283 = vunpack.c.l.b16 %v84
  %v284 = vunpack.c.l.b16 %v85
  %v285 = vunpack.c.l.b16 %v86
  %v286 = vunpack.c.l.b16 %v87
  %v287 = vunpack.c.l.b16 %v88
  %v288 = vunpack.c.l.b16 %v89
  %v289 = vunpack.c.l.b16 %v90
  %v290 = vunpack.c.l.b16 %v91
  %v291 = vunpack.c.l.b16 %v92
  %v292 = vunpack.c.l.b16 %v93
  %v293 = vunpack.c.l.b16 %v94
  %v294 = vunpack.c.l.b16 %v95
  %v295 = vunpack.c.l.b16 %v96
  %v296 = vunpack.c.l.b16 %v97
  %v297 = vunpack.c.l.b16 %v98
  %v298 = vunpack.c.l.b16 %v99
  %v299 = vunpack.c.l.b16 %v100
  %v300 = vunpack.c.l.b16 %v101
  %v301 = vunpack.c.l.b16 %v102
  %v302 = vunpack.c.l.b16 %v103
  %v303 = vunpack.c.l.b16 %v104
  %v304 = vunpack.c.l.b16 %v105
  %v305 = vunpack.c.l.b16 %v106
  %v306 = vunpack.c.l.b16 %v107
  %v307 = vunpack.c.l.b16 %v108
  %v308 = vunpack.c.l.b16 %v109
  %v309 = vunpack.c.l.b16 %v110
  %v310 = vunpack.c.l.b16 %v111
  %v311 = vunpack.c.l.b16 %v112
  %v312 = vunpack.c.l.b16 %v113
  %v313 = vunpack.c.l.b16 %v114
  %v314 = vunpack.c.l.b16 %v115
  %v315 = vunpack.c.l.b16 %v116
  %v316 = vunpack.c.l.b16 %v117
  %v317 = vunpack.c.l.b16 %v118
  %v318 = vunpack.c.l.b16 %v119
  %v319 = vunpack.c.l.b16 %v120
  %v320 = vunpack.c.l.b16 %v121
  %v321 = vunpack.c.l.b16 %v122
  %v322 = vunpack.c.l.b16 %v123
  %v323 = vunpack.c.l.b16 %v124
  %v324 = vunpack.c.l.b16 %v125
  %v325 = vunpack.c.l.b16 %v126
  %v326 = vunpack.c.l.b16 %v127
  %v327 = vunpack.c.l.b16 %v128
  %v328 = vpack.c.b16 %v233, %v232
  %v329 = vpack.c.b16 %v235, %v234
  %v330 = vpack.c.b16 %v237, %v236
  %v331 = vpack.c.b16 %v239, %v238
  %v332 = vpack.c.b16 %v241, %v240
  %v333 = vpack.c.b16 %v243, %v242
  %v334 = vpack.c.b16 %v245, %v244
  %v335 = vpack.c.b16 %v247, %v246
  %v336 = vpack.c.b16 %v249, %v248
  %v337 = vpack.c.b16 %v251, %v250
  %v338 = vpack.c.b16 %v253, %v252
  %v339 = vpack.c.b16 %v255, %v254
  %v340 = vpack.c.b16 %v257, %v256
  %v341 = vpack.c.b16 %v259, %v258
  %v342 = vpack.c.b16 %v261, %v260
  %v343 = vpack.c.b16 %v263, %v262
  %v344 = vpack.c.b16 %v265, %v264
  %v345 = vpack.c.b16 %v267, %v266
  %v346 = vpack.c.b16 %v269, %v268
  %v347 = vpack.c.b16 %v271, %v270
  %v348 = vpack.c.b16 %v273, %v272
  %v349 = vpack.c.b16 %v275, %v274
  %v350 = vpack.c.b16 %v277, %v276
  %v351 = vpack.c.b16 %v279, %v278
  %v352 = vpack.c.b16 %v281, %v280
  %v353 = vpack.c.b16 %v283, %v282
  %v354 = vpack.c.b16 %v285, %v284
  %v355 = vpack.c.b16 %v287, %v286
  %v356 = vpack.c.b16 %v289, %v288
  %v357 = vpack.c.b16 %v291, %v290
  %v358 = vpack.c.b16 %v293, %v292
  %v359 = vpack.c.b16 %v295, %v294
  %v360 = vpack.c.b16 %v297, %v296
  %v361 = vpack.c.b16 %v299, %v298
  %v362 = vpack.c.b16 %v301, %v300
  %v363 = vpack.c.b16 %v303, %v302
  %v364 = vpack.c.b16 %v305, %v304
  %v365 = vpack.c.b16 %v307, %v306
  %v366 = vpack.c.b16 %v309, %v308
  %v367 = vpack.c.b16 %v311, %v310
  %v368 = vpack.c.b16 %v313, %v312
  %v369 = vpack.c.b16 %v315, %v314
  %v370 = vpack.c.b16 %v317, %v316
  %v371 = vpack.c.b16 %v319, %v318
  %v372 = vpack.c.b16 %v321, %v320
  %v373 = vpack.c.b16 %v323, %v322
  %v374 = vpack.c.b16 %v325, %v324
  %v375 = vpack.c.b16 %v327, %v326
  %424 = vmatprep.subr.bf16.mxu0 0
  %425 = vmatpush1.bf16.msra.mxu0 %v328
  %426 = vmatprep.subr.bf16.mxu0 0
  %427 = vmatpush1.bf16.msra.mxu0 %v329
  %428 = vmatprep.subr.bf16.mxu0 0
  %429 = vmatpush1.bf16.msra.mxu0 %v330
  %430 = vmatprep.subr.bf16.mxu0 0
  %431 = vmatpush1.bf16.msra.mxu0 %v331
  %432 = vmatprep.subr.bf16.mxu0 0
  %433 = vmatpush1.bf16.msra.mxu0 %v332
  %434 = vmatprep.subr.bf16.mxu0 0
  %435 = vmatpush1.bf16.msra.mxu0 %v333
  %436 = vmatprep.subr.bf16.mxu0 0
  %437 = vmatpush1.bf16.msra.mxu0 %v334
  %438 = vmatprep.subr.bf16.mxu0 0
  %439 = vmatpush1.bf16.msra.mxu0 %v335
  %440 = vmatprep.subr.bf16.mxu0 0
  %441 = vmatpush1.bf16.msra.mxu0 %v336
  %442 = vmatprep.subr.bf16.mxu0 0
  %443 = vmatpush1.bf16.msra.mxu0 %v337
  %444 = vmatprep.subr.bf16.mxu0 0
  %445 = vmatpush1.bf16.msra.mxu0 %v338
  %446 = vmatprep.subr.bf16.mxu0 0
  %447 = vmatpush1.bf16.msra.mxu0 %v339
  %448 = vmatprep.subr.bf16.mxu0 0
  %449 = vmatpush1.bf16.msra.mxu0 %v340
  %450 = vmatprep.subr.bf16.mxu0 0
  %451 = vmatpush1.bf16.msra.mxu0 %v341
  %452 = vmatprep.subr.bf16.mxu0 0
  %453 = vmatpush1.bf16.msra.mxu0 %v342
  %454 = vmatprep.subr.bf16.mxu0 0
  %455 = vmatpush1.bf16.msra.mxu0 %v343
  %456 = vmatprep.mubr.bf16.mxu0 %v28
  %457 = vmatmul.mubr.bf16.gmra.mrb[0].mxu0 %v27
  %v458 = vpop.f32.mrb[0].mxu0
  %v459 = vadd.f32 %v134, %v458
  %v460 = vpop.f32.mrb[0].mxu0
  %v461 = vpop.f32.mrb[0].mxu0
  %v462 = vadd.f32 %v134, %v461
  %v463 = vpop.f32.mrb[0].mxu0
  %464 = vdwg.mxu0
  %465 = vmatprep.subr.bf16.mxu0 0
  %466 = vmatpush1.bf16.msra.mxu0 %v344
  %467 = vmatprep.subr.bf16.mxu0 0
  %468 = vmatpush1.bf16.msra.mxu0 %v345
  %469 = vmatprep.subr.bf16.mxu0 0
  %470 = vmatpush1.bf16.msra.mxu0 %v346
  %471 = vmatprep.subr.bf16.mxu0 0
  %472 = vmatpush1.bf16.msra.mxu0 %v347
  %473 = vmatprep.subr.bf16.mxu0 0
  %474 = vmatpush1.bf16.msra.mxu0 %v348
  %475 = vmatprep.subr.bf16.mxu0 0
  %476 = vmatpush1.bf16.msra.mxu0 %v349
  %477 = vmatprep.subr.bf16.mxu0 0
  %478 = vmatpush1.bf16.msra.mxu0 %v350
  %479 = vmatprep.subr.bf16.mxu0 0
  %480 = vmatpush1.bf16.msra.mxu0 %v351
  %481 = vmatprep.subr.bf16.mxu0 0
  %482 = vmatpush1.bf16.msra.mxu0 %v352
  %483 = vmatprep.subr.bf16.mxu0 0
  %484 = vmatpush1.bf16.msra.mxu0 %v353
  %485 = vmatprep.subr.bf16.mxu0 0
  %486 = vmatpush1.bf16.msra.mxu0 %v354
  %487 = vmatprep.subr.bf16.mxu0 0
  %488 = vmatpush1.bf16.msra.mxu0 %v355
  %489 = vmatprep.subr.bf16.mxu0 0
  %490 = vmatpush1.bf16.msra.mxu0 %v356
  %491 = vmatprep.subr.bf16.mxu0 0
  %492 = vmatpush1.bf16.msra.mxu0 %v357
  %493 = vmatprep.subr.bf16.mxu0 0
  %494 = vmatpush1.bf16.msra.mxu0 %v358
  %495 = vmatprep.subr.bf16.mxu0 0
  %496 = vmatpush1.bf16.msra.mxu0 %v359
  %497 = vmatprep.mubr.bf16.mxu0 %v30
  %498 = vmatmul.mubr.bf16.gmra.mrb[0].mxu0 %v29
  %v499 = vpop.f32.mrb[0].mxu0
  %v500 = vadd.f32 %v459, %v499
  %v501 = vpop.f32.mrb[0].mxu0
  %v502 = vpop.f32.mrb[0].mxu0
  %v503 = vadd.f32 %v462, %v502
  %v504 = vpop.f32.mrb[0].mxu0
  %505 = vdwg.mxu0
  %506 = vmatprep.subr.bf16.mxu0 0
  %507 = vmatpush1.bf16.msra.mxu0 %v360
  %508 = vmatprep.subr.bf16.mxu0 0
  %509 = vmatpush1.bf16.msra.mxu0 %v361
  %510 = vmatprep.subr.bf16.mxu0 0
  %511 = vmatpush1.bf16.msra.mxu0 %v362
  %512 = vmatprep.subr.bf16.mxu0 0
  %513 = vmatpush1.bf16.msra.mxu0 %v363
  %514 = vmatprep.subr.bf16.mxu0 0
  %515 = vmatpush1.bf16.msra.mxu0 %v364
  %516 = vmatprep.subr.bf16.mxu0 0
  %517 = vmatpush1.bf16.msra.mxu0 %v365
  %518 = vmatprep.subr.bf16.mxu0 0
  %519 = vmatpush1.bf16.msra.mxu0 %v366
  %520 = vmatprep.subr.bf16.mxu0 0
  %521 = vmatpush1.bf16.msra.mxu0 %v367
  %522 = vmatprep.subr.bf16.mxu0 0
  %523 = vmatpush1.bf16.msra.mxu0 %v368
  %524 = vmatprep.subr.bf16.mxu0 0
  %525 = vmatpush1.bf16.msra.mxu0 %v369
  %526 = vmatprep.subr.bf16.mxu0 0
  %527 = vmatpush1.bf16.msra.mxu0 %v370
  %528 = vmatprep.subr.bf16.mxu0 0
  %529 = vmatpush1.bf16.msra.mxu0 %v371
  %530 = vmatprep.subr.bf16.mxu0 0
  %531 = vmatpush1.bf16.msra.mxu0 %v372
  %532 = vmatprep.subr.bf16.mxu0 0
  %533 = vmatpush1.bf16.msra.mxu0 %v373
  %534 = vmatprep.subr.bf16.mxu0 0
  %535 = vmatpush1.bf16.msra.mxu0 %v374
  %536 = vmatprep.subr.bf16.mxu0 0
  %537 = vmatpush1.bf16.msra.mxu0 %v375
  %538 = vmatprep.mubr.bf16.mxu0 %v32
  %539 = vmatmul.mubr.bf16.gmra.mrb[0].mxu0 %v31
  %v540 = vpop.f32.mrb[0].mxu0
  %v541 = vadd.f32 %v500, %v540
  %v542 = vpop.f32.mrb[0].mxu0
  %v543 = vpop.f32.mrb[0].mxu0
  %v544 = vadd.f32 %v503, %v543
  %v545 = vpop.f32.mrb[0].mxu0
  %546 = vdwg.mxu0
  %vm547 = vcmask 64512
  %v548 = vsel %vm547, %v541, -inf
  %549 = vmax.xlane.f32.xlu0 %v548
  %v550 = vpop.xlane.xlu0 %549
  %v551 = vsel %vm547, %v544, -inf
  %552 = vmax.xlane.f32.xlu0 %v551
  %v553 = vpop.xlane.xlu0 %552
  %v554 = vsub.f32 %v541, %v550
  %v555 = vsub.f32 %v544, %v553
  %v556 = vmul.f32 %v554, 1.442695
  %v557 = vpow.pop %v556
  %v558 = vmul.f32 %v555, 1.442695
  %v559 = vpow.pop %v558
  %v560 = vsel %vm547, %v557, 0.0
  %561 = vadd.xlane.f32.xlu0 %v560
  %v562 = vpop.xlane.xlu0 %561
  %v563 = vsel %vm547, %v559, 0.0
  %564 = vadd.xlane.f32.xlu0 %v563
  %v565 = vpop.xlane.xlu0 %564
  %v566 = vrcp.pop %v562
  %v567 = vmul.f32 %v557, %v566
  %v568 = vrcp.pop %v565
  %v569 = vmul.f32 %v559, %v568
  %570 = vst.msk [vmem:[%s3] sm:$0xff] %vm547, %v567
  %571 = vst.msk [vmem:[%s3 + $0x8] sm:$0xff] %vm547, %v569
  // Predicated region
  $region14: #{tpu_custom_call.1} parent=0 // pred_check
    _
  $region15: #{tpu_custom_call.1} parent=0 // pred_check_branch
    %573 = sbr.rel (0) target = $region17
  $region16: #{tpu_custom_call.1} parent=0 // pred_region
    _
  $region17: #{tpu_custom_call.1} parent=0 // pred_fallthru
    _
  // Predicated region
  $region18: #{tpu_custom_call.1} parent=0 // pred_check
    _
  $region19: #{tpu_custom_call.1} parent=0 // pred_check_branch
    %575 = sbr.rel (0) target = $region21
  $region20: #{tpu_custom_call.1} parent=0 // pred_region
    _
  $region21: #{tpu_custom_call.1} parent=0 // pred_fallthru
    _

</llo_original>
